<compile_context>
chip_gen: v6e
topology: v6e:2x2x1
jax: 0.10.0
libtpu: 0.0.40
codegen_flags: <defaults>
</compile_context>

<pallas_src>
import jax
import jax.numpy as jnp
from jax.experimental import pallas as pl
from jax.experimental.pallas import tpu as pltpu

K = 7  # conv kernel size (fixed by the module)


def _glast_kernel(xc_ref, w_ref, b_ref, o_ref):
    # xc_ref: (1, 49*Cin, H*W)  im2col'd reflection-padded input (one batch elem)
    # w_ref:  (Cout, 49*Cin)    conv weights as a compact 2D slab
    # b_ref:  (Cout, 1)         bias (column vector, broadcasts over H*W lanes)
    # o_ref:  (1, Cout, H*W)    lane-dense output tile
    #
    # Single MXU matmul with K = 49*Cin (196); f32 accumulate.
    # (Keep f32 inputs at these tiny demo shapes to stay well inside the
    #  1e-3 tolerance; bf16 casts are a drop-in for larger production shapes.)
    acc = jnp.dot(w_ref[...], xc_ref[0],
                  preferred_element_type=jnp.float32)        # (Cout, H*W)
    acc = acc + b_ref[...]                                   # bias broadcast (VPU)
    o_ref[0] = jnp.tanh(acc).astype(o_ref.dtype)             # EUP tanh, lane-dense store


def glast_block(x_nchw, weight_hwio, bias):
    """Forward of GLastBlock.

    x_nchw:      (N, Cin, H, W)  float32 (PyTorch layout)
    weight_hwio: (7, 7, Cin, Cout)
    bias:        (Cout,)
    returns:     (N, Cout, H, W)
    """
    N, Cin, H, W = x_nchw.shape
    Cout = weight_hwio.shape[-1]
    HW = H * W
    KC = K * K * Cin  # contraction length (49 * Cin)

    # ---- wrapper glue: layout only, no FLOPs ------------------------------
    # Reflection pad (matches nn.ReflectionPad2d(3)).
    x_pad = jnp.pad(x_nchw, ((0, 0), (0, 0), (3, 3), (3, 3)), mode="reflect")

    # im2col (transposed form): X_col[n, tap*Cin + ci, i*W + j]
    #   = x_pad[n, ci, i+kh, j+kw],  tap = kh*7 + kw
    patches = [x_pad[:, :, kh:kh + H, kw:kw + W]
               for kh in range(K) for kw in range(K)]          # each (N, Cin, H, W)
    x_col = jnp.stack(patches, axis=1).reshape(N, KC, HW)       # (N, 49*Cin, H*W)

    # Weights as a lane-dense 2D slab: W2[co, tap*Cin + ci] = w_hwio[kh, kw, ci, co]
    w2 = jnp.transpose(weight_hwio, (3, 0, 1, 2)).reshape(Cout, KC)   # (Cout, 49*Cin)
    b2 = bias.reshape(Cout, 1)

    # ---- Pallas kernel: one matmul + bias + tanh per batch element --------
    out_flat = pl.pallas_call(
        _glast_kernel,
        out_shape=jax.ShapeDtypeStruct((N, Cout, HW), x_nchw.dtype),
        grid_spec=pltpu.PrefetchScalarGridSpec(
            num_scalar_prefetch=0,
            grid=(N,),  # keep a 'parallel' batch axis so v7x megacore gets both TCs
            in_specs=[
                pl.BlockSpec((1, KC, HW), lambda n: (n, 0, 0)),
                pl.BlockSpec((Cout, KC), lambda n: (0, 0)),
                pl.BlockSpec((Cout, 1), lambda n: (0, 0)),
            ],
            out_specs=pl.BlockSpec((1, Cout, HW), lambda n: (n, 0, 0)),
        ),
        compiler_params=pltpu.CompilerParams(
            dimension_semantics=("parallel",)),
    )(x_col, w2, b2)

    # Lane-dense (N, Cout, H*W) -> NCHW is a free reshape (no transpose HLO).
    return out_flat.reshape(N, Cout, H, W)


if __name__ == "__main__":
    # Small shapes consistent with the module: batch=2, in_channels=4,
    # out_channels=3, spatial=16x16.
    N, Cin, Cout, H, W = 2, 4, 3, 16, 16

    key = jax.random.PRNGKey(0)
    kx, kw, kb = jax.random.split(key, 3)

    x = jax.random.normal(kx, (N, Cin, H, W), dtype=jnp.float32)
    # Deterministic synthetic parameters (PyTorch conv weight shape is
    # (Cout, Cin, 7, 7); we store HWIO = (7, 7, Cin, Cout) for the kernel).
    fan_in = Cin * K * K
    bound = 1.0 / (fan_in ** 0.5)
    weight = jax.random.uniform(kw, (K, K, Cin, Cout), jnp.float32, -bound, bound)
    bias = jax.random.uniform(kb, (Cout,), jnp.float32, -bound, bound)

    out = glast_block(x, weight, bias)
    out = jax.block_until_ready(out)

    # Reference check against XLA conv (reflection pad + conv + tanh).
    x_pad_ref = jnp.pad(x, ((0, 0), (0, 0), (3, 3), (3, 3)), mode="reflect")
    w_oihw = jnp.transpose(weight, (3, 2, 0, 1))  # (Cout, Cin, 7, 7)
    ref = jax.lax.conv_general_dilated(
        x_pad_ref, w_oihw, window_strides=(1, 1), padding="VALID",
        dimension_numbers=("NCHW", "OIHW", "NCHW"))
    ref = jnp.tanh(ref + bias[None, :, None, None])

    assert out.shape == (N, Cout, H, W)
    assert jnp.allclose(out, ref, rtol=1e-3, atol=1e-3)
    print("KERNEL_OK")
</pallas_src>

<mosaic_0001>
module attributes {stable_mosaic.version = 11 : i64} {
  func.func @_glast_kernel(%arg0: i32, %arg1: memref<1x196x256xf32, #tpu.memory_space<vmem>>, %arg2: memref<3x196xf32, #tpu.memory_space<vmem>>, %arg3: memref<3x1xf32, #tpu.memory_space<vmem>>, %arg4: memref<1x3x256xf32, #tpu.memory_space<vmem>>) attributes {dimension_semantics = [#tpu.dimension_semantics<parallel>], iteration_bounds = array<i64: 2>, scalar_prefetch = 0 : i64, scratch_operands = 0 : i64, tpu.core_type = #tpu.core_type<tc>, window_params = [{transform_indices = @transform_0, window_bounds = array<i64: 1, 196, 256>}, {pipeline_mode = #tpu.pipeline_mode<synchronous>, transform_indices = @transform_1, window_bounds = array<i64: 3, 196>}, {pipeline_mode = #tpu.pipeline_mode<synchronous>, transform_indices = @transform_2, window_bounds = array<i64: 3, 1>}, {transform_indices = @transform_3, window_bounds = array<i64: 1, 3, 256>}]} {
    %c0 = arith.constant 0 : index
    %c0_0 = arith.constant 0 : index
    %0 = vector.load %arg2[%c0, %c0_0] : memref<3x196xf32, #tpu.memory_space<vmem>>, vector<3x196xf32>
    %c0_1 = arith.constant 0 : index
    %c0_2 = arith.constant 0 : index
    %c0_3 = arith.constant 0 : index
    %1 = vector.load %arg1[%c0_1, %c0_2, %c0_3] : memref<1x196x256xf32, #tpu.memory_space<vmem>>, vector<1x196x256xf32>
    %2 = vector.shape_cast %1 : vector<1x196x256xf32> to vector<196x256xf32>
    %cst = arith.constant dense<0.000000e+00> : vector<3x256xf32>
    %3 = tpu.matmul %0, %2, %cst {dimension_numbers = #tpu.dot_dimension_numbers<[1], [0], [0], [1], [0, 0, 1, 1], [], []>} : vector<3x196xf32>, vector<196x256xf32>, vector<3x256xf32> -> vector<3x256xf32>
    %c0_4 = arith.constant 0 : index
    %c0_5 = arith.constant 0 : index
    %4 = vector.load %arg3[%c0_4, %c0_5] : memref<3x1xf32, #tpu.memory_space<vmem>>, vector<3x1xf32>
    %5 = vector.broadcast %4 : vector<3x1xf32> to vector<3x256xf32>
    %6 = arith.addf %3, %5 : vector<3x256xf32>
    %7 = math.tanh %6 : vector<3x256xf32>
    %c0_6 = arith.constant 0 : index
    %c0_7 = arith.constant 0 : index
    %c0_8 = arith.constant 0 : index
    %8 = vector.load %arg4[%c0_6, %c0_7, %c0_8] : memref<1x3x256xf32, #tpu.memory_space<vmem>>, vector<1x3x256xf32>
    %9 = vector.shape_cast %8 : vector<1x3x256xf32> to vector<3x256xf32>
    %10 = vector.shape_cast %7 : vector<3x256xf32> to vector<1x3x256xf32>
    tpu.vector_store %arg4[%c0_6, %c0_7, %c0_8], %10 {strides = array<i32>} : memref<1x3x256xf32, #tpu.memory_space<vmem>>, vector<1x3x256xf32>,
    return
  }
  func.func @transform_0(%arg0: i32) -> (i32, i32, i32) {
    %c0_i32 = arith.constant 0 : i32
    %c0_i32_0 = arith.constant 0 : i32
    %c0_i32_1 = arith.constant 0 : i32
    return %arg0, %c0_i32, %c0_i32_0 : i32, i32, i32
  }
  func.func @transform_1(%arg0: i32) -> (i32, i32) {
    %c0_i32 = arith.constant 0 : i32
    %c0_i32_0 = arith.constant 0 : i32
    %c0_i32_1 = arith.constant 0 : i32
    return %c0_i32, %c0_i32_0 : i32, i32
  }
  func.func @transform_2(%arg0: i32) -> (i32, i32) {
    %c0_i32 = arith.constant 0 : i32
    %c0_i32_0 = arith.constant 0 : i32
    %c0_i32_1 = arith.constant 0 : i32
    return %c0_i32, %c0_i32_0 : i32, i32
  }
  func.func @transform_3(%arg0: i32) -> (i32, i32, i32) {
    %c0_i32 = arith.constant 0 : i32
    %c0_i32_0 = arith.constant 0 : i32
    %c0_i32_1 = arith.constant 0 : i32
    return %arg0, %c0_i32, %c0_i32_0 : i32, i32, i32
  }
}

</mosaic_0001>

<llo_original>
// kernel: tpu_custom_call.1
$region0: #{tpu_custom_call.1}
  #allocation0 [shape = 'u32[]', space=smem, size = 0x4, offset = 0x4, fixed_abs, tag = 'smem constant byte address 0x4 - core index']
  #allocation1 [shape = 'u32[144,128]{1,0:T(1,128)}', space=vmem, size = 0x12000, scoped, tag = 'internal scratch']
  %s0 = inlined_call_operand.vmem [shape: f32[2,196,256], index: 0, kind: input, shape index: {}]
  %s1 = inlined_call_operand.vmem [shape: f32[3,196], index: 1, kind: input, shape index: {}]
  %s2 = inlined_call_operand.vmem [shape: f32[3,1], index: 2, kind: input, shape index: {}]
  %s3 = inlined_call_operand.vmem [shape: f32[2,3,256], index: 3, kind: output, shape index: {}]
  %s4 = sld [smem:[#allocation0]]
  $region45: #{tpu_custom_call.1} parent=0
    _
  %s6 = ssub.s32 1, %s4
  %s7 = scalar_select 0, %s6, %s4
  loop: start=0, step=1, limit=4
  $region2: #{tpu_custom_call.1} parent=0 // loop_pre_header
    _
  $region3: #{tpu_custom_call.1} parent=0 // loop_header
    %s9 = sphi 0, %s13
    %p10 = scmp.ge.s32.totalorder %s9, 4
    %s19 = sphi 0, %s21
    %s22 = sphi 0, %s19
    %s23 = sphi 0, %s22
    %s39 = sphi 0, %s23
    %s43 = sphi 0, %s43
    %s45 = sphi 0, %s43
    %s46 = sphi 0, %s45
    %s60 = sphi 0, %s46
    %s64 = sphi 0, %s64
    %s66 = sphi 0, %s64
    %s67 = sphi 0, %s66
    %s81 = sphi 0, %s67
    %s87 = sphi 0, %s89
    %s90 = sphi 0, %s87
    %s91 = sphi 0, %s90
    %s107 = sphi 0, %s91
  $region4: #{tpu_custom_call.1} parent=0 // loop_header_branch
    %12 = sbr.rel (%p10) target = $region8
  $region5: #{tpu_custom_call.1} parent=0 // loop_body
    %s14 = ssub.s32 %s9, 1
    %s15 = ssub.s32 %s9, 2
    %s16 = sadd.s32 %s9, 1
    %s17 = ssub.s32 %s9, %s16
    %p18 = scmp.eq.s32.totalorder %s17, 0
    %s20 = sadd.s32 %s19, 1
    %s21 = scalar_select %p18, %s19, %s20
    %p24 = pneg %p18
    %p25 = scmp.eq.s32.totalorder %s9, 1
    %p26 = por %p24, %p25
    %p27 = scmp.ne.s32.totalorder %s19, %s22
    %p28 = scmp.eq.s32.totalorder %s9, 0
    %p29 = por %p27, %p28
    %p30 = scmp.ne.s32.totalorder %s19, %s22
    %p31 = scmp.eq.s32.totalorder %s14, 1
    %p32 = por %p30, %p31
    %p33 = scmp.ne.s32.totalorder %s22, %s23
    %p34 = scmp.eq.s32.totalorder %s14, 0
    %p35 = por %p33, %p34
    %p36 = scmp.ne.s32.totalorder %s22, %s23
    %p37 = scmp.eq.s32.totalorder %s15, 1
    %p38 = por %p36, %p37
    %p40 = scmp.ne.s32.totalorder %s23, %s39
    %p41 = scmp.eq.s32.totalorder %s15, 0
    %p42 = por %p40, %p41
    %s44 = sadd.s32 %s43, 1
    %p47 = scmp.eq.s32.totalorder %s9, 1
    %p48 = scmp.ne.s32.totalorder %s43, %s45
    %p49 = scmp.eq.s32.totalorder %s9, 0
    %p50 = por %p48, %p49
    %p51 = scmp.ne.s32.totalorder %s43, %s45
    %p52 = scmp.eq.s32.totalorder %s14, 1
    %p53 = por %p51, %p52
    %p54 = scmp.ne.s32.totalorder %s45, %s46
    %p55 = scmp.eq.s32.totalorder %s14, 0
    %p56 = por %p54, %p55
    %p57 = scmp.ne.s32.totalorder %s45, %s46
    %p58 = scmp.eq.s32.totalorder %s15, 1
    %p59 = por %p57, %p58
    %p61 = scmp.ne.s32.totalorder %s46, %s60
    %p62 = scmp.eq.s32.totalorder %s15, 0
    %p63 = por %p61, %p62
    %s65 = sadd.s32 %s64, 1
    %p68 = scmp.eq.s32.totalorder %s9, 1
    %p69 = scmp.ne.s32.totalorder %s64, %s66
    %p70 = scmp.eq.s32.totalorder %s9, 0
    %p71 = por %p69, %p70
    %p72 = scmp.ne.s32.totalorder %s64, %s66
    %p73 = scmp.eq.s32.totalorder %s14, 1
    %p74 = por %p72, %p73
    %p75 = scmp.ne.s32.totalorder %s66, %s67
    %p76 = scmp.eq.s32.totalorder %s14, 0
    %p77 = por %p75, %p76
    %p78 = scmp.ne.s32.totalorder %s66, %s67
    %p79 = scmp.eq.s32.totalorder %s15, 1
    %p80 = por %p78, %p79
    %p82 = scmp.ne.s32.totalorder %s67, %s81
    %p83 = scmp.eq.s32.totalorder %s15, 0
    %p84 = por %p82, %p83
    %s85 = ssub.s32 %s9, %s16
    %p86 = scmp.eq.s32.totalorder %s85, 0
    %s88 = sadd.s32 %s87, 1
    %s89 = scalar_select %p86, %s87, %s88
    %p92 = pneg %p86
    %p93 = scmp.eq.s32.totalorder %s9, 1
    %p94 = por %p92, %p93
    %p95 = scmp.ne.s32.totalorder %s87, %s90
    %p96 = scmp.eq.s32.totalorder %s9, 0
    %p97 = por %p95, %p96
    %p98 = scmp.ne.s32.totalorder %s87, %s90
    %p99 = scmp.eq.s32.totalorder %s14, 1
    %p100 = por %p98, %p99
    %p101 = scmp.ne.s32.totalorder %s90, %s91
    %p102 = scmp.eq.s32.totalorder %s14, 0
    %p103 = por %p101, %p102
    %p104 = scmp.ne.s32.totalorder %s90, %s91
    %p105 = scmp.eq.s32.totalorder %s15, 1
    %p106 = por %p104, %p105
    %p108 = scmp.ne.s32.totalorder %s91, %s107
    %p109 = scmp.eq.s32.totalorder %s15, 0
    %p110 = por %p108, %p109
    %p111 = scmp.le.s32.totalorder 1, %s9
    %p112 = scmp.lt.s32.totalorder %s9, 3
    %p113 = pnand %p111, %p112
    %p114 = pneg %p113
    // Predicated region
    $region9: #{tpu_custom_call.1} parent=5 // pred_check
      _
    $region10: #{tpu_custom_call.1} parent=5 // pred_check_branch
      %116 = sbr.rel (%p113) target = $region12
    $region11: #{tpu_custom_call.1} parent=5 // pred_region
      %s117 = ssub.s32 %s9, 1
      // Predicated region
      $region13: #{tpu_custom_call.1} parent=11 // pred_check
        %p118 = pneg %p56
      $region14: #{tpu_custom_call.1} parent=11 // pred_check_branch
        %120 = sbr.rel (%p118) target = $region16
      $region15: #{tpu_custom_call.1} parent=11 // pred_region
        _
      $region16: #{tpu_custom_call.1} parent=11 // pred_fallthru
        _
      // Predicated region
      $region17: #{tpu_custom_call.1} parent=11 // pred_check
        %p121 = pneg %p77
      $region18: #{tpu_custom_call.1} parent=11 // pred_check_branch
        %123 = sbr.rel (%p121) target = $region20
      $region19: #{tpu_custom_call.1} parent=11 // pred_region
        _
      $region20: #{tpu_custom_call.1} parent=11 // pred_fallthru
        _
    $region12: #{tpu_custom_call.1} parent=5 // pred_fallthru
      _
    %p124 = scmp.lt.s32.totalorder %s9, 2
    // Predicated region
    $region21: #{tpu_custom_call.1} parent=5 // pred_check
      %p125 = pneg %p124
    $region22: #{tpu_custom_call.1} parent=5 // pred_check_branch
      %127 = sbr.rel (%p125) target = $region24
    $region23: #{tpu_custom_call.1} parent=5 // pred_region
      // Predicated region
      $region25: #{tpu_custom_call.1} parent=23 // pred_check
        %p128 = pneg %p29
      $region26: #{tpu_custom_call.1} parent=23 // pred_check_branch
        %130 = sbr.rel (%p128) target = $region28
      $region27: #{tpu_custom_call.1} parent=23 // pred_region
        %p131 = scmp.lt.s32.totalorder %s9, 1
        %s132 = scalar_select %p131, %s9, 1
        %s133 = smul.addr %s132, 50
        %s134 = smul.addr %s133, 8
        %s135 = scalar_lea.vmem %s0, %s134
      $region28: #{tpu_custom_call.1} parent=23 // pred_fallthru
        _
    $region24: #{tpu_custom_call.1} parent=5 // pred_fallthru
      _
    %p136 = scmp.le.s32.totalorder 1, %s9
    %p137 = scmp.lt.s32.totalorder %s9, 3
    %p138 = pnand %p136, %p137
    %p139 = pneg %p138
    // Predicated region
    $region29: #{tpu_custom_call.1} parent=5 // pred_check
      _
    $region30: #{tpu_custom_call.1} parent=5 // pred_check_branch
      %141 = sbr.rel (%p138) target = $region32
    $region31: #{tpu_custom_call.1} parent=5 // pred_region
      %s142 = ssub.s32 %s9, 1
      %p143 = scmp.lt.s32.totalorder %s14, 1
      %s144 = scalar_select %p143, %s14, 1
      %s145 = smul.addr %s144, 50
      %s146 = smul.addr %s145, 8
      %s147 = scalar_lea.vmem %s0, %s146
      %p148 = pneg %p35
      %p149 = pneg %p32
      %p150 = pneg %p56
      %p151 = pneg %p53
      %p152 = pneg %p77
      %p153 = pneg %p74
      %p154 = pneg %p103
      %p155 = pneg %p100
      %p156 = scmp.lt.s32.totalorder %s14, 1
      %s157 = scalar_select %p156, %s14, 1
      %s158 = smul.addr %s157, 2
      %s159 = smul.addr %s158, 4
      %s160 = scalar_lea.vmem %s3, %s159
      %p161 = scmp.lt.s32.totalorder %s14, 1
      %s162 = scalar_select %p161, %s14, 1
      %s163 = smul.addr %s162, 50
      %s164 = smul.addr %s163, 8
      %s165 = scalar_lea.vmem %s0, %s164
      %p166 = scmp.lt.s32.totalorder %s14, 1
      %s167 = scalar_select %p166, %s14, 1
      %s168 = smul.addr %s167, 2
      %s169 = smul.addr %s168, 4
      %s170 = scalar_lea.vmem %s3, %s169
      %v171 = vld [vmem:[%s1] sm:$0x77]
      %v172 = vld [vmem:[%s165] sm:$0xff]
      %v173 = vld [vmem:[%s165 + $0x8] sm:$0xff]
      %v174 = vld [vmem:[%s165 + $0x10] sm:$0xff]
      %v175 = vld [vmem:[%s165 + $0x18] sm:$0xff]
      %v176 = vld [vmem:[%s165 + $0x20] sm:$0xff]
      %v177 = vld [vmem:[%s165 + $0x28] sm:$0xff]
      %v178 = vld [vmem:[%s165 + $0x30] sm:$0xff]
      %v179 = vld [vmem:[%s165 + $0x38] sm:$0xff]
      %v180 = vld [vmem:[%s165 + $0x40] sm:$0xff]
      %v181 = vld [vmem:[%s165 + $0x48] sm:$0xff]
      %v182 = vld [vmem:[%s165 + $0x50] sm:$0xff]
      %v183 = vld [vmem:[%s165 + $0x58] sm:$0xff]
      %v184 = vld [vmem:[%s165 + $0x60] sm:$0xff]
      %v185 = vld [vmem:[%s165 + $0x68] sm:$0xff]
      %v186 = vld [vmem:[%s165 + $0x70] sm:$0xff]
      %v187 = vld [vmem:[%s165 + $0x78] sm:$0xff]
      %v188 = vld [vmem:[%s165 + $0x80] sm:$0xff]
      %v189 = vld [vmem:[%s165 + $0x88] sm:$0xff]
      %v190 = vld [vmem:[%s165 + $0x90] sm:$0xff]
      %v191 = vld [vmem:[%s165 + $0x98] sm:$0xff]
      %v192 = vld [vmem:[%s165 + $0xa0] sm:$0xff]
      %v193 = vld [vmem:[%s165 + $0xa8] sm:$0xff]
      %v194 = vld [vmem:[%s165 + $0xb0] sm:$0xff]
      %v195 = vld [vmem:[%s165 + $0xb8] sm:$0xff]
      %v196 = vld [vmem:[%s165 + $0xc0] sm:$0xff]
      %v197 = vld [vmem:[%s165 + $0xc8] sm:$0xff]
      %v198 = vld [vmem:[%s165 + $0xd0] sm:$0xff]
      %v199 = vld [vmem:[%s165 + $0xd8] sm:$0xff]
      %v200 = vld [vmem:[%s165 + $0xe0] sm:$0xff]
      %v201 = vld [vmem:[%s165 + $0xe8] sm:$0xff]
      %v202 = vld [vmem:[%s165 + $0xf0] sm:$0xff]
      %v203 = vld [vmem:[%s165 + $0xf8] sm:$0xff]
      %v204 = vld [vmem:[%s165 + $0x100] sm:$0xff]
      %v205 = vld [vmem:[%s165 + $0x108] sm:$0xff]
      %v206 = vld [vmem:[%s165 + $0x110] sm:$0xff]
      %v207 = vld [vmem:[%s165 + $0x118] sm:$0xff]
      %v208 = vld [vmem:[%s165 + $0x120] sm:$0xff]
      %v209 = vld [vmem:[%s165 + $0x128] sm:$0xff]
      %v210 = vld [vmem:[%s165 + $0x130] sm:$0xff]
      %v211 = vld [vmem:[%s165 + $0x138] sm:$0xff]
      %v212 = vld [vmem:[%s165 + $0x140] sm:$0xff]
      %v213 = vld [vmem:[%s165 + $0x148] sm:$0xff]
      %v214 = vld [vmem:[%s165 + $0x150] sm:$0xff]
      %v215 = vld [vmem:[%s165 + $0x158] sm:$0xff]
      %v216 = vld [vmem:[%s165 + $0x160] sm:$0xff]
      %v217 = vld [vmem:[%s165 + $0x168] sm:$0xff]
      %v218 = vld [vmem:[%s165 + $0x170] sm:$0xff]
      %v219 = vld [vmem:[%s165 + $0x178] sm:$0xff]
      %v220 = vld [vmem:[%s165 + $0x180] sm:$0xf]
      %v221 = vld [vmem:[%s165 + $0x188] sm:$0xf]
      %v222 = vld [vmem:[%s2] sm:$0x7]
      %224 = vset.pattern.permute.xlu0 0
      %225 = vperm.xlu0 %224, %v222
      %v226 = vpop.permute.xlu0 %225
      %v229 = vcombine.high %v171, %v171
      %vm230 = vcmask 556032
      %v231 = vsel %vm230, %v229, 0
      %vm233 = vcmask 1043456
      %v235 = vsel %vm233, %v220, 0
      %v238 = vsel %vm233, %v221, 0
      %240 = vmatprep.subr.mxu0 %v203
      %241 = vmatpush1.msra.mxu0 %v202
      %242 = vmatprep.subr.mxu0 %v201
      %243 = vmatpush1.msra.mxu0 %v200
      %244 = vmatprep.subr.mxu0 %v199
      %245 = vmatpush1.msra.mxu0 %v198
      %246 = vmatprep.subr.mxu0 %v197
      %247 = vmatpush1.msra.mxu0 %v196
      %248 = vmatprep.subr.mxu0 %v195
      %249 = vmatpush1.msra.mxu0 %v194
      %250 = vmatprep.subr.mxu0 %v193
      %251 = vmatpush1.msra.mxu0 %v192
      %252 = vmatprep.subr.mxu0 %v191
      %253 = vmatpush1.msra.mxu0 %v190
      %254 = vmatprep.subr.mxu0 %v189
      %255 = vmatpush1.msra.mxu0 %v188
      %256 = vmatprep.subr.mxu0 %v187
      %257 = vmatpush1.msra.mxu0 %v186
      %258 = vmatprep.subr.mxu0 %v185
      %259 = vmatpush1.msra.mxu0 %v184
      %260 = vmatprep.subr.mxu0 %v183
      %261 = vmatpush1.msra.mxu0 %v182
      %262 = vmatprep.subr.mxu0 %v181
      %263 = vmatpush1.msra.mxu0 %v180
      %264 = vmatprep.subr.mxu0 %v179
      %265 = vmatpush1.msra.mxu0 %v178
      %266 = vmatprep.subr.mxu0 %v177
      %267 = vmatpush1.msra.mxu0 %v176
      %268 = vmatprep.subr.mxu0 %v175
      %269 = vmatpush1.msra.mxu0 %v174
      %270 = vmatprep.subr.mxu0 %v173
      %271 = vmatpush1.msra.mxu0 %v172
      %272 = vmatprep.subr.mxu0 0.0
      %273 = vmatpush2.msra.mxu0 0.0
      %274 = vmatprep.subr.mxu0 0.0
      %275 = vmatpush2.msra.mxu0 0.0
      %276 = vmatprep.subr.mxu0 0.0
      %277 = vmatpush2.msra.mxu0 0.0
      %278 = vmatprep.subr.mxu0 0.0
      %279 = vmatpush2.msra.mxu0 0.0
      %280 = vmatprep.subr.mxu0 0.0
      %281 = vmatpush2.msra.mxu0 0.0
      %282 = vmatprep.subr.mxu0 0.0
      %283 = vmatpush2.msra.mxu0 0.0
      %284 = vmatprep.subr.mxu0 0.0
      %285 = vmatpush2.msra.mxu0 0.0
      %286 = vmatprep.subr.mxu0 %v238
      %287 = vmatpush2.msra.mxu0 %v235
      %288 = vmatprep.subr.mxu0 %v219
      %289 = vmatpush2.msra.mxu0 %v218
      %290 = vmatprep.subr.mxu0 %v217
      %291 = vmatpush2.msra.mxu0 %v216
      %292 = vmatprep.subr.mxu0 %v215
      %293 = vmatpush2.msra.mxu0 %v214
      %294 = vmatprep.subr.mxu0 %v213
      %295 = vmatpush2.msra.mxu0 %v212
      %296 = vmatprep.subr.mxu0 %v211
      %297 = vmatpush2.msra.mxu0 %v210
      %298 = vmatprep.subr.mxu0 %v209
      %299 = vmatpush2.msra.mxu0 %v208
      %300 = vmatprep.subr.mxu0 %v207
      %301 = vmatpush2.msra.mxu0 %v206
      %302 = vmatprep.subr.mxu0 %v205
      %303 = vmatpush2.msra.mxu0 %v204
      %304 = vmatprep.mubr.f32.mxu0 %v231
      %305 = vmatmul.mubr.f32.gmra.mxu0 %v171
      %v306 = vpop.f32.mrf.mxu0
      %v307 = vadd.f32 %v226, %v306
      %v308 = vpop.f32.mrf.mxu0
      %v309 = vadd.f32 %v226, %v308
      %310 = vdwg.mxu0
      %v311 = vtanh.pop %v307
      %v312 = vtanh.pop %v309
      %v315 = vcombine.low %v311, %v312
      %317 = vst [vmem:[%s170] sm:$0x77] %v315
      %p318 = scmp.lt.s32.totalorder %s14, 1
      %s319 = scalar_select %p318, %s14, 1
      %s320 = smul.addr %s319, 2
      %s321 = smul.addr %s320, 4
      %s322 = scalar_lea.vmem %s3, %s321
      // Predicated region
      $region33: #{tpu_custom_call.1} parent=31 // pred_check
        %p323 = pneg %p100
      $region34: #{tpu_custom_call.1} parent=31 // pred_check_branch
        %325 = sbr.rel (%p323) target = $region36
      $region35: #{tpu_custom_call.1} parent=31 // pred_region
        _
      $region36: #{tpu_custom_call.1} parent=31 // pred_fallthru
        _
    $region32: #{tpu_custom_call.1} parent=5 // pred_fallthru
      _
    %p326 = scmp.le.s32.totalorder 2, %s9
    // Predicated region
    $region37: #{tpu_custom_call.1} parent=5 // pred_check
      %p327 = pneg %p326
    $region38: #{tpu_custom_call.1} parent=5 // pred_check_branch
      %329 = sbr.rel (%p327) target = $region40
    $region39: #{tpu_custom_call.1} parent=5 // pred_region
      %s330 = ssub.s32 %s9, 2
      // Predicated region
      $region41: #{tpu_custom_call.1} parent=39 // pred_check
        %p331 = pneg %p106
      $region42: #{tpu_custom_call.1} parent=39 // pred_check_branch
        %333 = sbr.rel (%p331) target = $region44
      $region43: #{tpu_custom_call.1} parent=39 // pred_region
        %p334 = scmp.lt.s32.totalorder %s15, 1
        %s335 = scalar_select %p334, %s15, 1
        %s336 = smul.addr %s335, 2
        %s337 = smul.addr %s336, 4
        %s338 = scalar_lea.vmem %s3, %s337
      $region44: #{tpu_custom_call.1} parent=39 // pred_fallthru
        _
    $region40: #{tpu_custom_call.1} parent=5 // pred_fallthru
      _
  $region6: #{tpu_custom_call.1} parent=0 // loop_footer
    %s13 = sadd.s32 1, %s9
  $region7: #{tpu_custom_call.1} parent=0 // loop_footer_branch
    %8 = sbr.rel target = $region3
  $region8: #{tpu_custom_call.1} parent=0 // loop_exit
    _

</llo_original>
